<compile_context>
chip_gen: v5e
topology: v5e:2x2
jax: 0.10.0
libtpu: 0.0.40
codegen_flags: <defaults>
</compile_context>

<pallas_src>
import functools

import jax
import jax.numpy as jnp
from jax.experimental import pallas as pl
from jax.experimental.pallas import tpu as pltpu


def _round_up(x, m):
    return ((x + m - 1) // m) * m


def _fc4_kernel(x_ref, w1_ref, b1_ref, w2_ref, b2_ref,
                w3_ref, b3_ref, w4_ref, b4_ref, o_ref):
    """Fused 4-layer MLP on one batch tile; activations never leave VMEM/vregs."""
    mxu_dtype = w1_ref.dtype  # bf16 (or f32) operands for the MXU
    # In-kernel cast: cheap VPU work hidden under MXU slack (no wrapper HBM pass).
    x = x_ref[...].astype(mxu_dtype)
    h = jnp.dot(x, w1_ref[...], preferred_element_type=jnp.float32)
    h = jnp.maximum(h + b1_ref[...], 0.0).astype(mxu_dtype)
    h = jnp.dot(h, w2_ref[...], preferred_element_type=jnp.float32)
    h = jnp.maximum(h + b2_ref[...], 0.0).astype(mxu_dtype)
    h = jnp.dot(h, w3_ref[...], preferred_element_type=jnp.float32)
    h = jnp.maximum(h + b3_ref[...], 0.0).astype(mxu_dtype)
    h = jnp.dot(h, w4_ref[...], preferred_element_type=jnp.float32)
    o_ref[...] = (h + b4_ref[...]).astype(o_ref.dtype)


@functools.partial(jax.jit, static_argnames=("block_m", "use_bf16", "out_dtype"))
def fc4_forward(x, params, *, block_m=1024, use_bf16=True, out_dtype=None):
    """x: (B, input_dim). params: w1..w4 stored (in, out) = torch weight.T, b1..b4 (1, out)."""
    B, D_in = x.shape
    D_out = params["w4"].shape[1]
    out_dtype = x.dtype if out_dtype is None else out_dtype
    compute_dtype = jnp.bfloat16 if use_bf16 else jnp.float32

    # Batch tile: multiple of 16 for bf16 sublane packing (8 for f32), no
    # larger than the (rounded-up) batch.  No wrapper-side padding of x:
    # the grid uses cdiv and Pallas masks the partial last block.
    row_tile = 16 if use_bf16 else 8
    bm = min(_round_up(block_m, row_tile), _round_up(B, row_tile))
    if bm > B:
        bm = _round_up(B, 8)          # tiny batches: single exact block
    # v7x has 2 TensorCores: make sure large batches give >= 2 "parallel" steps.
    if B >= 512 and pl.cdiv(B, bm) < 2:
        bm = _round_up(pl.cdiv(B, 2), row_tile)
    grid = (pl.cdiv(B, bm),)

    # Lane-dense output: pad the last layer to a multiple of 128 lanes
    # (weights only -- tiny, grid-invariant).  Do NOT pad layer-1 K or
    # layer-4 N further to "fill" the MXU; that is a net loss.
    N_pad = _round_up(D_out, 128)
    w4 = jnp.pad(params["w4"], ((0, 0), (0, N_pad - D_out)))
    b4 = jnp.pad(params["b4"], ((0, 0), (0, N_pad - D_out)))

    # bf16 matmul operands; biases stay f32 (added to f32 accumulators).
    w1 = params["w1"].astype(compute_dtype)
    w2 = params["w2"].astype(compute_dtype)
    w3 = params["w3"].astype(compute_dtype)
    w4 = w4.astype(compute_dtype)
    b1 = params["b1"].astype(jnp.float32)
    b2 = params["b2"].astype(jnp.float32)
    b3 = params["b3"].astype(jnp.float32)
    b4 = b4.astype(jnp.float32)

    # Weights/biases are grid-invariant and small: replicate the full tensors.
    full = lambda arr: pl.BlockSpec(arr.shape, lambda i, _nd=arr.ndim: (0,) * _nd)

    out = pl.pallas_call(
        _fc4_kernel,
        out_shape=jax.ShapeDtypeStruct((B, N_pad), out_dtype),
        grid_spec=pltpu.PrefetchScalarGridSpec(
            num_scalar_prefetch=0,
            grid=grid,
            in_specs=[
                pl.BlockSpec((bm, D_in), lambda i: (i, 0)),  # x batch tile (f32)
                full(w1), full(b1),
                full(w2), full(b2),
                full(w3), full(b3),
                full(w4), full(b4),
            ],
            out_specs=pl.BlockSpec((bm, N_pad), lambda i: (i, 0)),
        ),
        compiler_params=pltpu.CompilerParams(
            dimension_semantics=("parallel",),
            vmem_limit_bytes=32 * 1024 * 1024,
        ),
    )(x, w1, b1, w2, b2, w3, b3, w4, b4)

    # Drop the lane padding (tiny copy; fuses with the consumer under jit).
    return out[:, :D_out]


def init_params(key, input_dim, output_dim):
    """Deterministic init mimicking nn.Linear (uniform +-1/sqrt(fan_in)).
    Weights stored as (in, out) = PyTorch weight.T."""
    dims = [(input_dim, 128), (128, 256), (256, 512), (512, output_dim)]
    params = {}
    for idx, (fan_in, fan_out) in enumerate(dims, start=1):
        key, kw, kb = jax.random.split(key, 3)
        bound = 1.0 / (fan_in ** 0.5)
        params[f"w{idx}"] = jax.random.uniform(
            kw, (fan_in, fan_out), jnp.float32, -bound, bound)
        params[f"b{idx}"] = jax.random.uniform(
            kb, (1, fan_out), jnp.float32, -bound, bound)
    return params


def fc4_reference(x, params):
    h = x
    for idx in range(1, 5):
        h = h @ params[f"w{idx}"] + params[f"b{idx}"]
        if idx < 4:
            h = jnp.maximum(h, 0.0)
    return h


if __name__ == "__main__":
    key = jax.random.PRNGKey(0)
    k_param, k_x = jax.random.split(key)

    input_dim, output_dim, batch = 32, 10, 8
    params = init_params(k_param, input_dim, output_dim)
    x = jax.random.normal(k_x, (batch, input_dim), jnp.float32)

    # bf16 MXU path (default).
    out = jax.block_until_ready(fc4_forward(x, params))
    ref = fc4_reference(x, params)
    assert out.shape == (batch, output_dim)
    assert jnp.allclose(out, ref, atol=5e-2, rtol=5e-2), "mismatch vs reference (bf16)"

    # f32 parity path (tight tolerance).
    out_f32 = jax.block_until_ready(fc4_forward(x, params, use_bf16=False))
    assert jnp.allclose(out_f32, ref, atol=1e-4, rtol=1e-4), "mismatch vs reference (f32)"

    # Multi-step grid with a partial last tile (B=40, bm=16 -> 3 steps).
    x2 = jax.random.normal(jax.random.PRNGKey(1), (40, input_dim), jnp.float32)
    out2 = jax.block_until_ready(fc4_forward(x2, params, block_m=16))
    ref2 = fc4_reference(x2, params)
    assert out2.shape == (40, output_dim)
    assert jnp.allclose(out2, ref2, atol=5e-2, rtol=5e-2), "mismatch vs reference (tiled)"

    print("KERNEL_OK")
</pallas_src>

<mosaic_0001>
module attributes {stable_mosaic.version = 11 : i64} {
  func.func @_fc4_kernel(%arg0: i32, %arg1: memref<8x32xf32, #tpu.memory_space<vmem>>, %arg2: memref<32x128xbf16, #tpu.memory_space<vmem>>, %arg3: memref<1x128xf32, #tpu.memory_space<vmem>>, %arg4: memref<128x256xbf16, #tpu.memory_space<vmem>>, %arg5: memref<1x256xf32, #tpu.memory_space<vmem>>, %arg6: memref<256x512xbf16, #tpu.memory_space<vmem>>, %arg7: memref<1x512xf32, #tpu.memory_space<vmem>>, %arg8: memref<512x128xbf16, #tpu.memory_space<vmem>>, %arg9: memref<1x128xf32, #tpu.memory_space<vmem>>, %arg10: memref<8x128xf32, #tpu.memory_space<vmem>>) attributes {dimension_semantics = [#tpu.dimension_semantics<parallel>], iteration_bounds = array<i64: 1>, scalar_prefetch = 0 : i64, scratch_operands = 0 : i64, tpu.core_type = #tpu.core_type<tc>, window_params = [{transform_indices = @transform_0, window_bounds = array<i64: 8, 32>}, {pipeline_mode = #tpu.pipeline_mode<synchronous>, transform_indices = @transform_1, window_bounds = array<i64: 32, 128>}, {pipeline_mode = #tpu.pipeline_mode<synchronous>, transform_indices = @transform_2, window_bounds = array<i64: 1, 128>}, {pipeline_mode = #tpu.pipeline_mode<synchronous>, transform_indices = @transform_3, window_bounds = array<i64: 128, 256>}, {pipeline_mode = #tpu.pipeline_mode<synchronous>, transform_indices = @transform_4, window_bounds = array<i64: 1, 256>}, {pipeline_mode = #tpu.pipeline_mode<synchronous>, transform_indices = @transform_5, window_bounds = array<i64: 256, 512>}, {pipeline_mode = #tpu.pipeline_mode<synchronous>, transform_indices = @transform_6, window_bounds = array<i64: 1, 512>}, {pipeline_mode = #tpu.pipeline_mode<synchronous>, transform_indices = @transform_7, window_bounds = array<i64: 512, 128>}, {pipeline_mode = #tpu.pipeline_mode<synchronous>, transform_indices = @transform_8, window_bounds = array<i64: 1, 128>}, {transform_indices = @transform_9, window_bounds = array<i64: 8, 128>}]} {
    %c0 = arith.constant 0 : index
    %c0_0 = arith.constant 0 : index
    %0 = vector.load %arg1[%c0, %c0_0] : memref<8x32xf32, #tpu.memory_space<vmem>>, vector<8x32xf32>
    %1 = arith.truncf %0 : vector<8x32xf32> to vector<8x32xbf16>
    %c0_1 = arith.constant 0 : index
    %c0_2 = arith.constant 0 : index
    %2 = vector.load %arg2[%c0_1, %c0_2] : memref<32x128xbf16, #tpu.memory_space<vmem>>, vector<32x128xbf16>
    %cst = arith.constant dense<0.000000e+00> : vector<8x128xf32>
    %3 = tpu.matmul %1, %2, %cst {dimension_numbers = #tpu.dot_dimension_numbers<[1], [0], [0], [1], [0, 0, 1, 1], [], []>} : vector<8x32xbf16>, vector<32x128xbf16>, vector<8x128xf32> -> vector<8x128xf32>
    %c0_3 = arith.constant 0 : index
    %c0_4 = arith.constant 0 : index
    %4 = vector.load %arg3[%c0_3, %c0_4] : memref<1x128xf32, #tpu.memory_space<vmem>>, vector<1x128xf32>
    %5 = vector.broadcast %4 : vector<1x128xf32> to vector<8x128xf32>
    %6 = arith.addf %3, %5 : vector<8x128xf32>
    %cst_5 = arith.constant 0.000000e+00 : f32
    %7 = vector.broadcast %cst_5 : f32 to vector<8x128xf32>
    %8 = arith.maximumf %6, %7 : vector<8x128xf32>
    %9 = arith.truncf %8 : vector<8x128xf32> to vector<8x128xbf16>
    %c0_6 = arith.constant 0 : index
    %c0_7 = arith.constant 0 : index
    %10 = vector.load %arg4[%c0_6, %c0_7] : memref<128x256xbf16, #tpu.memory_space<vmem>>, vector<128x256xbf16>
    %cst_8 = arith.constant dense<0.000000e+00> : vector<8x256xf32>
    %11 = tpu.matmul %9, %10, %cst_8 {dimension_numbers = #tpu.dot_dimension_numbers<[1], [0], [0], [1], [0, 0, 1, 1], [], []>} : vector<8x128xbf16>, vector<128x256xbf16>, vector<8x256xf32> -> vector<8x256xf32>
    %c0_9 = arith.constant 0 : index
    %c0_10 = arith.constant 0 : index
    %12 = vector.load %arg5[%c0_9, %c0_10] : memref<1x256xf32, #tpu.memory_space<vmem>>, vector<1x256xf32>
    %13 = vector.broadcast %12 : vector<1x256xf32> to vector<8x256xf32>
    %14 = arith.addf %11, %13 : vector<8x256xf32>
    %cst_11 = arith.constant 0.000000e+00 : f32
    %15 = vector.broadcast %cst_11 : f32 to vector<8x256xf32>
    %16 = arith.maximumf %14, %15 : vector<8x256xf32>
    %17 = arith.truncf %16 : vector<8x256xf32> to vector<8x256xbf16>
    %c0_12 = arith.constant 0 : index
    %c0_13 = arith.constant 0 : index
    %18 = vector.load %arg6[%c0_12, %c0_13] : memref<256x512xbf16, #tpu.memory_space<vmem>>, vector<256x512xbf16>
    %cst_14 = arith.constant dense<0.000000e+00> : vector<8x512xf32>
    %19 = tpu.matmul %17, %18, %cst_14 {dimension_numbers = #tpu.dot_dimension_numbers<[1], [0], [0], [1], [0, 0, 1, 1], [], []>} : vector<8x256xbf16>, vector<256x512xbf16>, vector<8x512xf32> -> vector<8x512xf32>
    %c0_15 = arith.constant 0 : index
    %c0_16 = arith.constant 0 : index
    %20 = vector.load %arg7[%c0_15, %c0_16] : memref<1x512xf32, #tpu.memory_space<vmem>>, vector<1x512xf32>
    %21 = vector.broadcast %20 : vector<1x512xf32> to vector<8x512xf32>
    %22 = arith.addf %19, %21 : vector<8x512xf32>
    %cst_17 = arith.constant 0.000000e+00 : f32
    %23 = vector.broadcast %cst_17 : f32 to vector<8x512xf32>
    %24 = arith.maximumf %22, %23 : vector<8x512xf32>
    %25 = arith.truncf %24 : vector<8x512xf32> to vector<8x512xbf16>
    %c0_18 = arith.constant 0 : index
    %c0_19 = arith.constant 0 : index
    %26 = vector.load %arg8[%c0_18, %c0_19] : memref<512x128xbf16, #tpu.memory_space<vmem>>, vector<512x128xbf16>
    %cst_20 = arith.constant dense<0.000000e+00> : vector<8x128xf32>
    %27 = tpu.matmul %25, %26, %cst_20 {dimension_numbers = #tpu.dot_dimension_numbers<[1], [0], [0], [1], [0, 0, 1, 1], [], []>} : vector<8x512xbf16>, vector<512x128xbf16>, vector<8x128xf32> -> vector<8x128xf32>
    %c0_21 = arith.constant 0 : index
    %c0_22 = arith.constant 0 : index
    %28 = vector.load %arg9[%c0_21, %c0_22] : memref<1x128xf32, #tpu.memory_space<vmem>>, vector<1x128xf32>
    %29 = vector.broadcast %28 : vector<1x128xf32> to vector<8x128xf32>
    %30 = arith.addf %27, %29 : vector<8x128xf32>
    %c0_23 = arith.constant 0 : index
    %c0_24 = arith.constant 0 : index
    %31 = vector.load %arg10[%c0_23, %c0_24] : memref<8x128xf32, #tpu.memory_space<vmem>>, vector<8x128xf32>
    tpu.vector_store %arg10[%c0_23, %c0_24], %30 {strides = array<i32>} : memref<8x128xf32, #tpu.memory_space<vmem>>, vector<8x128xf32>,
    return
  }
  func.func @transform_0(%arg0: i32) -> (i32, i32) {
    %c0_i32 = arith.constant 0 : i32
    %c0_i32_0 = arith.constant 0 : i32
    return %arg0, %c0_i32 : i32, i32
  }
  func.func @transform_1(%arg0: i32) -> (i32, i32) {
    %c0_i32 = arith.constant 0 : i32
    %c0_i32_0 = arith.constant 0 : i32
    %c0_i32_1 = arith.constant 0 : i32
    return %c0_i32, %c0_i32_0 : i32, i32
  }
  func.func @transform_2(%arg0: i32) -> (i32, i32) {
    %c0_i32 = arith.constant 0 : i32
    %c0_i32_0 = arith.constant 0 : i32
    %c0_i32_1 = arith.constant 0 : i32
    return %c0_i32, %c0_i32_0 : i32, i32
  }
  func.func @transform_3(%arg0: i32) -> (i32, i32) {
    %c0_i32 = arith.constant 0 : i32
    %c0_i32_0 = arith.constant 0 : i32
    %c0_i32_1 = arith.constant 0 : i32
    return %c0_i32, %c0_i32_0 : i32, i32
  }
  func.func @transform_4(%arg0: i32) -> (i32, i32) {
    %c0_i32 = arith.constant 0 : i32
    %c0_i32_0 = arith.constant 0 : i32
    %c0_i32_1 = arith.constant 0 : i32
    return %c0_i32, %c0_i32_0 : i32, i32
  }
  func.func @transform_5(%arg0: i32) -> (i32, i32) {
    %c0_i32 = arith.constant 0 : i32
    %c0_i32_0 = arith.constant 0 : i32
    %c0_i32_1 = arith.constant 0 : i32
    return %c0_i32, %c0_i32_0 : i32, i32
  }
  func.func @transform_6(%arg0: i32) -> (i32, i32) {
    %c0_i32 = arith.constant 0 : i32
    %c0_i32_0 = arith.constant 0 : i32
    %c0_i32_1 = arith.constant 0 : i32
    return %c0_i32, %c0_i32_0 : i32, i32
  }
  func.func @transform_7(%arg0: i32) -> (i32, i32) {
    %c0_i32 = arith.constant 0 : i32
    %c0_i32_0 = arith.constant 0 : i32
    %c0_i32_1 = arith.constant 0 : i32
    return %c0_i32, %c0_i32_0 : i32, i32
  }
  func.func @transform_8(%arg0: i32) -> (i32, i32) {
    %c0_i32 = arith.constant 0 : i32
    %c0_i32_0 = arith.constant 0 : i32
    %c0_i32_1 = arith.constant 0 : i32
    return %c0_i32, %c0_i32_0 : i32, i32
  }
  func.func @transform_9(%arg0: i32) -> (i32, i32) {
    %c0_i32 = arith.constant 0 : i32
    %c0_i32_0 = arith.constant 0 : i32
    return %arg0, %c0_i32 : i32, i32
  }
}

</mosaic_0001>

<llo_original>
// kernel: fc4_forward.1
$region0: #{fc4_forward.1}
  #allocation0 [shape = 'u32[]', space=smem, size = 0x4, offset = 0x4, fixed_abs, tag = 'smem constant byte address 0x4 - core index']
  #allocation1 [shape = 'u32[72,128]{1,0:T(1,128)}', space=vmem, size = 0x9000, scoped, tag = 'internal scratch']
  %s0 = inlined_call_operand.vmem [shape: f32[8,32], index: 0, kind: input, shape index: {}]
  %s1 = inlined_call_operand.vmem [shape: bf16[32,128], index: 1, kind: input, shape index: {}]
  %s2 = inlined_call_operand.vmem [shape: f32[1,128], index: 2, kind: input, shape index: {}]
  %s3 = inlined_call_operand.vmem [shape: bf16[128,256], index: 3, kind: input, shape index: {}]
  %s4 = inlined_call_operand.vmem [shape: f32[1,256], index: 4, kind: input, shape index: {}]
  %s5 = inlined_call_operand.vmem [shape: bf16[256,512], index: 5, kind: input, shape index: {}]
  %s6 = inlined_call_operand.vmem [shape: f32[1,512], index: 6, kind: input, shape index: {}]
  %s7 = inlined_call_operand.vmem [shape: bf16[512,128], index: 7, kind: input, shape index: {}]
  %s8 = inlined_call_operand.vmem [shape: f32[1,128], index: 8, kind: input, shape index: {}]
  %s9 = inlined_call_operand.hbm [shape: f32[8,128], index: 9, kind: output, shape index: {}]
  %s10 = sld [smem:[#allocation0]]
  $region46: #{fc4_forward.1} parent=0
    _
  %s12 = ssub.s32 1, %s10
  %s13 = scalar_select 0, %s12, %s10
  $region1: #{fc4_forward.1} parent=0
    #allocation2 [shape = 'u8[4096]{0}', space=vmem, size = 0x1000, scoped, tag = 'output window, operand 0, single buffered']
    #allocation3 [shape = 's32[1]{0}', space=sflag, size = 0x4, scoped, tag = 'scoped memory for fc4_forward.1']
    %14 = vsyncpa [#allocation3], 0
    // Predicated region
    $region2: #{fc4_forward.1} parent=1 // pred_check
      _
    $region3: #{fc4_forward.1} parent=1 // pred_check_branch
      %16 = sbr.rel (0) target = $region5
    $region4: #{fc4_forward.1} parent=1 // pred_region
      _
    $region5: #{fc4_forward.1} parent=1 // pred_fallthru
      _
    // Predicated region
    $region6: #{fc4_forward.1} parent=1 // pred_check
      _
    $region7: #{fc4_forward.1} parent=1 // pred_check_branch
      %18 = sbr.rel (0) target = $region9
    $region8: #{fc4_forward.1} parent=1 // pred_region
      _
    $region9: #{fc4_forward.1} parent=1 // pred_fallthru
      _
    // Predicated region
    $region10: #{fc4_forward.1} parent=1 // pred_check
      _
    $region11: #{fc4_forward.1} parent=1 // pred_check_branch
      %20 = sbr.rel (0) target = $region13
    $region12: #{fc4_forward.1} parent=1 // pred_region
      _
    $region13: #{fc4_forward.1} parent=1 // pred_fallthru
      _
    // Predicated region
    $region14: #{fc4_forward.1} parent=1 // pred_check
      _
    $region15: #{fc4_forward.1} parent=1 // pred_check_branch
      %22 = sbr.rel (0) target = $region17
    $region16: #{fc4_forward.1} parent=1 // pred_region
      _
    $region17: #{fc4_forward.1} parent=1 // pred_fallthru
      _
    // Predicated region
    $region18: #{fc4_forward.1} parent=1 // pred_check
      _
    $region19: #{fc4_forward.1} parent=1 // pred_check_branch
      %24 = sbr.rel (0) target = $region21
    $region20: #{fc4_forward.1} parent=1 // pred_region
      _
    $region21: #{fc4_forward.1} parent=1 // pred_fallthru
      _
    // Predicated region
    $region22: #{fc4_forward.1} parent=1 // pred_check
      _
    $region23: #{fc4_forward.1} parent=1 // pred_check_branch
      %26 = sbr.rel (0) target = $region25
    $region24: #{fc4_forward.1} parent=1 // pred_region
      _
    $region25: #{fc4_forward.1} parent=1 // pred_fallthru
      _
    // Predicated region
    $region26: #{fc4_forward.1} parent=1 // pred_check
      _
    $region27: #{fc4_forward.1} parent=1 // pred_check_branch
      %28 = sbr.rel (0) target = $region29
    $region28: #{fc4_forward.1} parent=1 // pred_region
      _
    $region29: #{fc4_forward.1} parent=1 // pred_fallthru
      _
    // Predicated region
    $region30: #{fc4_forward.1} parent=1 // pred_check
      _
    $region31: #{fc4_forward.1} parent=1 // pred_check_branch
      %30 = sbr.rel (0) target = $region33
    $region32: #{fc4_forward.1} parent=1 // pred_region
      _
    $region33: #{fc4_forward.1} parent=1 // pred_fallthru
      _
    // Predicated region
    $region34: #{fc4_forward.1} parent=1 // pred_check
      _
    $region35: #{fc4_forward.1} parent=1 // pred_check_branch
      %32 = sbr.rel (0) target = $region37
    $region36: #{fc4_forward.1} parent=1 // pred_region
      _
    $region37: #{fc4_forward.1} parent=1 // pred_fallthru
      _
    %v34 = vld [vmem:[%s0] sm:$0xff]
    %v35 = vpack.c.bf16 %v34, %v34
    %v36 = vld [vmem:[%s1] sm:$0xf]
    %v37 = vld [vmem:[%s1 + $0x4] sm:$0xf]
    %v38 = vld [vmem:[%s1 + $0x8] sm:$0xf]
    %v39 = vld [vmem:[%s1 + $0xc] sm:$0xf]
    %v40 = vld [vmem:[%s2] sm:$0x1]
    %v42 = vperm.slane %v40, 0
    %v48 = vunpack.c.l.b16 %v36
    %v49 = vunpack.c.l.b16 %v37
    %v50 = vunpack.c.l.b16 %v38
    %v51 = vunpack.c.l.b16 %v39
    %v52 = vpack.c.b16 %v49, %v48
    %v53 = vpack.c.b16 %v51, %v50
    %vm56 = vcmask 261120
    %v58 = vsel %vm56, %v35, 0
    %60 = vmatpush.bf16.msra.mxu0 0
    %61 = vmatpush.bf16.msra.mxu0 0
    %62 = vmatpush.bf16.msra.mxu0 0
    %63 = vmatpush.bf16.msra.mxu0 0
    %64 = vmatpush.bf16.msra.mxu0 0
    %65 = vmatpush.bf16.msra.mxu0 0
    %66 = vmatpush.bf16.msra.mxu0 %v53
    %67 = vmatpush.bf16.msra.mxu0 %v52
    %68 = vmatmul.bf16.gmra.mxu0 %v58
    %v69 = vpop.f32.mrf.mxu0
    %v70 = vadd.f32 %v42, %v69
    %v71 = vpop.f32.mrf.mxu0
    %72 = vdwg.mxu0
    %v73 = vmax.f32 %v70, 0.0
    %v74 = vpack.c.bf16 %v73, %v73
    %v75 = vld [vmem:[%s3] sm:$0xff]
    %v76 = vld [vmem:[%s3 + $0x8] sm:$0xff]
    %v77 = vld [vmem:[%s3 + $0x10] sm:$0xff]
    %v78 = vld [vmem:[%s3 + $0x18] sm:$0xff]
    %v79 = vld [vmem:[%s3 + $0x20] sm:$0xff]
    %v80 = vld [vmem:[%s3 + $0x28] sm:$0xff]
    %v81 = vld [vmem:[%s3 + $0x30] sm:$0xff]
    %v82 = vld [vmem:[%s3 + $0x38] sm:$0xff]
    %v83 = vld [vmem:[%s3 + $0x40] sm:$0xff]
    %v84 = vld [vmem:[%s3 + $0x48] sm:$0xff]
    %v85 = vld [vmem:[%s3 + $0x50] sm:$0xff]
    %v86 = vld [vmem:[%s3 + $0x58] sm:$0xff]
    %v87 = vld [vmem:[%s3 + $0x60] sm:$0xff]
    %v88 = vld [vmem:[%s3 + $0x68] sm:$0xff]
    %v89 = vld [vmem:[%s3 + $0x70] sm:$0xff]
    %v90 = vld [vmem:[%s3 + $0x78] sm:$0xff]
    %v91 = vld [vmem:[%s4] sm:$0x3]
    %v93 = vperm.slane %v91, 0
    %v94 = vperm.slane %v91, 1
    %v113 = vunpack.c.l.b16 %v75
    %v114 = vunpack.c.h.b16 %v75
    %v115 = vunpack.c.l.b16 %v76
    %v116 = vunpack.c.h.b16 %v76
    %v117 = vunpack.c.l.b16 %v77
    %v118 = vunpack.c.h.b16 %v77
    %v119 = vunpack.c.l.b16 %v78
    %v120 = vunpack.c.h.b16 %v78
    %v121 = vunpack.c.l.b16 %v79
    %v122 = vunpack.c.h.b16 %v79
    %v123 = vunpack.c.l.b16 %v80
    %v124 = vunpack.c.h.b16 %v80
    %v125 = vunpack.c.l.b16 %v81
    %v126 = vunpack.c.h.b16 %v81
    %v127 = vunpack.c.l.b16 %v82
    %v128 = vunpack.c.h.b16 %v82
    %v129 = vunpack.c.l.b16 %v83
    %v130 = vunpack.c.h.b16 %v83
    %v131 = vunpack.c.l.b16 %v84
    %v132 = vunpack.c.h.b16 %v84
    %v133 = vunpack.c.l.b16 %v85
    %v134 = vunpack.c.h.b16 %v85
    %v135 = vunpack.c.l.b16 %v86
    %v136 = vunpack.c.h.b16 %v86
    %v137 = vunpack.c.l.b16 %v87
    %v138 = vunpack.c.h.b16 %v87
    %v139 = vunpack.c.l.b16 %v88
    %v140 = vunpack.c.h.b16 %v88
    %v141 = vunpack.c.l.b16 %v89
    %v142 = vunpack.c.h.b16 %v89
    %v143 = vunpack.c.l.b16 %v90
    %v144 = vunpack.c.h.b16 %v90
    %v145 = vpack.c.b16 %v115, %v113
    %v146 = vpack.c.b16 %v116, %v114
    %v147 = vpack.c.b16 %v119, %v117
    %v148 = vpack.c.b16 %v120, %v118
    %v149 = vpack.c.b16 %v123, %v121
    %v150 = vpack.c.b16 %v124, %v122
    %v151 = vpack.c.b16 %v127, %v125
    %v152 = vpack.c.b16 %v128, %v126
    %v153 = vpack.c.b16 %v131, %v129
    %v154 = vpack.c.b16 %v132, %v130
    %v155 = vpack.c.b16 %v135, %v133
    %v156 = vpack.c.b16 %v136, %v134
    %v157 = vpack.c.b16 %v139, %v137
    %v158 = vpack.c.b16 %v140, %v138
    %v159 = vpack.c.b16 %v143, %v141
    %v160 = vpack.c.b16 %v144, %v142
    %177 = vmatpush.bf16.msra.mxu0 %v159
    %178 = vmatpush.bf16.msra.mxu0 %v157
    %179 = vmatpush.bf16.msra.mxu0 %v155
    %180 = vmatpush.bf16.msra.mxu0 %v153
    %181 = vmatpush.bf16.msra.mxu0 %v151
    %182 = vmatpush.bf16.msra.mxu0 %v149
    %183 = vmatpush.bf16.msra.mxu0 %v147
    %184 = vmatpush.bf16.msra.mxu0 %v145
    %185 = vmatmul.bf16.gmra.mxu0 %v74
    %v186 = vpop.f32.mrf.mxu0
    %v187 = vadd.f32 %v93, %v186
    %v188 = vpop.f32.mrf.mxu0
    %189 = vdwg.mxu0
    %190 = vmatpush.bf16.msra.mxu0 %v160
    %191 = vmatpush.bf16.msra.mxu0 %v158
    %192 = vmatpush.bf16.msra.mxu0 %v156
    %193 = vmatpush.bf16.msra.mxu0 %v154
    %194 = vmatpush.bf16.msra.mxu0 %v152
    %195 = vmatpush.bf16.msra.mxu0 %v150
    %196 = vmatpush.bf16.msra.mxu0 %v148
    %197 = vmatpush.bf16.msra.mxu0 %v146
    %198 = vmatmul.bf16.gmra.mxu0 %v74
    %v199 = vpop.f32.mrf.mxu0
    %v200 = vadd.f32 %v94, %v199
    %v201 = vpop.f32.mrf.mxu0
    %202 = vdwg.mxu0
    %v203 = vmax.f32 %v187, 0.0
    %v204 = vmax.f32 %v200, 0.0
    %v205 = vpack.c.bf16 %v203, %v203
    %v206 = vpack.c.bf16 %v204, %v204
    %v207 = vld [vmem:[%s5] sm:$0xff]
    %v208 = vld [vmem:[%s5 + $0x8] sm:$0xff]
    %v209 = vld [vmem:[%s5 + $0x10] sm:$0xff]
    %v210 = vld [vmem:[%s5 + $0x18] sm:$0xff]
    %v211 = vld [vmem:[%s5 + $0x20] sm:$0xff]
    %v212 = vld [vmem:[%s5 + $0x28] sm:$0xff]
    %v213 = vld [vmem:[%s5 + $0x30] sm:$0xff]
    %v214 = vld [vmem:[%s5 + $0x38] sm:$0xff]
    %v215 = vld [vmem:[%s5 + $0x40] sm:$0xff]
    %v216 = vld [vmem:[%s5 + $0x48] sm:$0xff]
    %v217 = vld [vmem:[%s5 + $0x50] sm:$0xff]
    %v218 = vld [vmem:[%s5 + $0x58] sm:$0xff]
    %v219 = vld [vmem:[%s5 + $0x60] sm:$0xff]
    %v220 = vld [vmem:[%s5 + $0x68] sm:$0xff]
    %v221 = vld [vmem:[%s5 + $0x70] sm:$0xff]
    %v222 = vld [vmem:[%s5 + $0x78] sm:$0xff]
    %v223 = vld [vmem:[%s5 + $0x80] sm:$0xff]
    %v224 = vld [vmem:[%s5 + $0x88] sm:$0xff]
    %v225 = vld [vmem:[%s5 + $0x90] sm:$0xff]
    %v226 = vld [vmem:[%s5 + $0x98] sm:$0xff]
    %v227 = vld [vmem:[%s5 + $0xa0] sm:$0xff]
    %v228 = vld [vmem:[%s5 + $0xa8] sm:$0xff]
    %v229 = vld [vmem:[%s5 + $0xb0] sm:$0xff]
    %v230 = vld [vmem:[%s5 + $0xb8] sm:$0xff]
    %v231 = vld [vmem:[%s5 + $0xc0] sm:$0xff]
    %v232 = vld [vmem:[%s5 + $0xc8] sm:$0xff]
    %v233 = vld [vmem:[%s5 + $0xd0] sm:$0xff]
    %v234 = vld [vmem:[%s5 + $0xd8] sm:$0xff]
    %v235 = vld [vmem:[%s5 + $0xe0] sm:$0xff]
    %v236 = vld [vmem:[%s5 + $0xe8] sm:$0xff]
    %v237 = vld [vmem:[%s5 + $0xf0] sm:$0xff]
    %v238 = vld [vmem:[%s5 + $0xf8] sm:$0xff]
    %v239 = vld [vmem:[%s5 + $0x100] sm:$0xff]
    %v240 = vld [vmem:[%s5 + $0x108] sm:$0xff]
    %v241 = vld [vmem:[%s5 + $0x110] sm:$0xff]
    %v242 = vld [vmem:[%s5 + $0x118] sm:$0xff]
    %v243 = vld [vmem:[%s5 + $0x120] sm:$0xff]
    %v244 = vld [vmem:[%s5 + $0x128] sm:$0xff]
    %v245 = vld [vmem:[%s5 + $0x130] sm:$0xff]
    %v246 = vld [vmem:[%s5 + $0x138] sm:$0xff]
    %v247 = vld [vmem:[%s5 + $0x140] sm:$0xff]
    %v248 = vld [vmem:[%s5 + $0x148] sm:$0xff]
    %v249 = vld [vmem:[%s5 + $0x150] sm:$0xff]
    %v250 = vld [vmem:[%s5 + $0x158] sm:$0xff]
    %v251 = vld [vmem:[%s5 + $0x160] sm:$0xff]
    %v252 = vld [vmem:[%s5 + $0x168] sm:$0xff]
    %v253 = vld [vmem:[%s5 + $0x170] sm:$0xff]
    %v254 = vld [vmem:[%s5 + $0x178] sm:$0xff]
    %v255 = vld [vmem:[%s5 + $0x180] sm:$0xff]
    %v256 = vld [vmem:[%s5 + $0x188] sm:$0xff]
    %v257 = vld [vmem:[%s5 + $0x190] sm:$0xff]
    %v258 = vld [vmem:[%s5 + $0x198] sm:$0xff]
    %v259 = vld [vmem:[%s5 + $0x1a0] sm:$0xff]
    %v260 = vld [vmem:[%s5 + $0x1a8] sm:$0xff]
    %v261 = vld [vmem:[%s5 + $0x1b0] sm:$0xff]
    %v262 = vld [vmem:[%s5 + $0x1b8] sm:$0xff]
    %v263 = vld [vmem:[%s5 + $0x1c0] sm:$0xff]
    %v264 = vld [vmem:[%s5 + $0x1c8] sm:$0xff]
    %v265 = vld [vmem:[%s5 + $0x1d0] sm:$0xff]
    %v266 = vld [vmem:[%s5 + $0x1d8] sm:$0xff]
    %v267 = vld [vmem:[%s5 + $0x1e0] sm:$0xff]
    %v268 = vld [vmem:[%s5 + $0x1e8] sm:$0xff]
    %v269 = vld [vmem:[%s5 + $0x1f0] sm:$0xff]
    %v270 = vld [vmem:[%s5 + $0x1f8] sm:$0xff]
    %v271 = vld [vmem:[%s6] sm:$0xf]
    %v273 = vperm.slane %v271, 0
    %v274 = vperm.slane %v271, 1
    %v275 = vperm.slane %v271, 2
    %v276 = vperm.slane %v271, 3
    %v345 = vunpack.c.l.b16 %v207
    %v346 = vunpack.c.h.b16 %v207
    %v347 = vunpack.c.l.b16 %v208
    %v348 = vunpack.c.h.b16 %v208
    %v349 = vunpack.c.l.b16 %v209
    %v350 = vunpack.c.h.b16 %v209
    %v351 = vunpack.c.l.b16 %v210
    %v352 = vunpack.c.h.b16 %v210
    %v353 = vunpack.c.l.b16 %v211
    %v354 = vunpack.c.h.b16 %v211
    %v355 = vunpack.c.l.b16 %v212
    %v356 = vunpack.c.h.b16 %v212
    %v357 = vunpack.c.l.b16 %v213
    %v358 = vunpack.c.h.b16 %v213
    %v359 = vunpack.c.l.b16 %v214
    %v360 = vunpack.c.h.b16 %v214
    %v361 = vunpack.c.l.b16 %v215
    %v362 = vunpack.c.h.b16 %v215
    %v363 = vunpack.c.l.b16 %v216
    %v364 = vunpack.c.h.b16 %v216
    %v365 = vunpack.c.l.b16 %v217
    %v366 = vunpack.c.h.b16 %v217
    %v367 = vunpack.c.l.b16 %v218
    %v368 = vunpack.c.h.b16 %v218
    %v369 = vunpack.c.l.b16 %v219
    %v370 = vunpack.c.h.b16 %v219
    %v371 = vunpack.c.l.b16 %v220
    %v372 = vunpack.c.h.b16 %v220
    %v373 = vunpack.c.l.b16 %v221
    %v374 = vunpack.c.h.b16 %v221
    %v375 = vunpack.c.l.b16 %v222
    %v376 = vunpack.c.h.b16 %v222
    %v377 = vunpack.c.l.b16 %v223
    %v378 = vunpack.c.h.b16 %v223
    %v379 = vunpack.c.l.b16 %v224
    %v380 = vunpack.c.h.b16 %v224
    %v381 = vunpack.c.l.b16 %v225
    %v382 = vunpack.c.h.b16 %v225
    %v383 = vunpack.c.l.b16 %v226
    %v384 = vunpack.c.h.b16 %v226
    %v385 = vunpack.c.l.b16 %v227
    %v386 = vunpack.c.h.b16 %v227
    %v387 = vunpack.c.l.b16 %v228
    %v388 = vunpack.c.h.b16 %v228
    %v389 = vunpack.c.l.b16 %v229
    %v390 = vunpack.c.h.b16 %v229
    %v391 = vunpack.c.l.b16 %v230
    %v392 = vunpack.c.h.b16 %v230
    %v393 = vunpack.c.l.b16 %v231
    %v394 = vunpack.c.h.b16 %v231
    %v395 = vunpack.c.l.b16 %v232
    %v396 = vunpack.c.h.b16 %v232
    %v397 = vunpack.c.l.b16 %v233
    %v398 = vunpack.c.h.b16 %v233
    %v399 = vunpack.c.l.b16 %v234
    %v400 = vunpack.c.h.b16 %v234
    %v401 = vunpack.c.l.b16 %v235
    %v402 = vunpack.c.h.b16 %v235
    %v403 = vunpack.c.l.b16 %v236
    %v404 = vunpack.c.h.b16 %v236
    %v405 = vunpack.c.l.b16 %v237
    %v406 = vunpack.c.h.b16 %v237
    %v407 = vunpack.c.l.b16 %v238
    %v408 = vunpack.c.h.b16 %v238
    %v409 = vunpack.c.l.b16 %v239
    %v410 = vunpack.c.h.b16 %v239
    %v411 = vunpack.c.l.b16 %v240
    %v412 = vunpack.c.h.b16 %v240
    %v413 = vunpack.c.l.b16 %v241
    %v414 = vunpack.c.h.b16 %v241
    %v415 = vunpack.c.l.b16 %v242
    %v416 = vunpack.c.h.b16 %v242
    %v417 = vunpack.c.l.b16 %v243
    %v418 = vunpack.c.h.b16 %v243
    %v419 = vunpack.c.l.b16 %v244
    %v420 = vunpack.c.h.b16 %v244
    %v421 = vunpack.c.l.b16 %v245
    %v422 = vunpack.c.h.b16 %v245
    %v423 = vunpack.c.l.b16 %v246
    %v424 = vunpack.c.h.b16 %v246
    %v425 = vunpack.c.l.b16 %v247
    %v426 = vunpack.c.h.b16 %v247
    %v427 = vunpack.c.l.b16 %v248
    %v428 = vunpack.c.h.b16 %v248
    %v429 = vunpack.c.l.b16 %v249
    %v430 = vunpack.c.h.b16 %v249
    %v431 = vunpack.c.l.b16 %v250
    %v432 = vunpack.c.h.b16 %v250
    %v433 = vunpack.c.l.b16 %v251
    %v434 = vunpack.c.h.b16 %v251
    %v435 = vunpack.c.l.b16 %v252
    %v436 = vunpack.c.h.b16 %v252
    %v437 = vunpack.c.l.b16 %v253
    %v438 = vunpack.c.h.b16 %v253
    %v439 = vunpack.c.l.b16 %v254
    %v440 = vunpack.c.h.b16 %v254
    %v441 = vunpack.c.l.b16 %v255
    %v442 = vunpack.c.h.b16 %v255
    %v443 = vunpack.c.l.b16 %v256
    %v444 = vunpack.c.h.b16 %v256
    %v445 = vunpack.c.l.b16 %v257
    %v446 = vunpack.c.h.b16 %v257
    %v447 = vunpack.c.l.b16 %v258
    %v448 = vunpack.c.h.b16 %v258
    %v449 = vunpack.c.l.b16 %v259
    %v450 = vunpack.c.h.b16 %v259
    %v451 = vunpack.c.l.b16 %v260
    %v452 = vunpack.c.h.b16 %v260
    %v453 = vunpack.c.l.b16 %v261
    %v454 = vunpack.c.h.b16 %v261
    %v455 = vunpack.c.l.b16 %v262
    %v456 = vunpack.c.h.b16 %v262
    %v457 = vunpack.c.l.b16 %v263
    %v458 = vunpack.c.h.b16 %v263
    %v459 = vunpack.c.l.b16 %v264
    %v460 = vunpack.c.h.b16 %v264
    %v461 = vunpack.c.l.b16 %v265
    %v462 = vunpack.c.h.b16 %v265
    %v463 = vunpack.c.l.b16 %v266
    %v464 = vunpack.c.h.b16 %v266
    %v465 = vunpack.c.l.b16 %v267
    %v466 = vunpack.c.h.b16 %v267
    %v467 = vunpack.c.l.b16 %v268
    %v468 = vunpack.c.h.b16 %v268
    %v469 = vunpack.c.l.b16 %v269
    %v470 = vunpack.c.h.b16 %v269
    %v471 = vunpack.c.l.b16 %v270
    %v472 = vunpack.c.h.b16 %v270
    %v473 = vpack.c.b16 %v349, %v345
    %v474 = vpack.c.b16 %v350, %v346
    %v475 = vpack.c.b16 %v351, %v347
    %v476 = vpack.c.b16 %v352, %v348
    %v477 = vpack.c.b16 %v357, %v353
    %v478 = vpack.c.b16 %v358, %v354
    %v479 = vpack.c.b16 %v359, %v355
    %v480 = vpack.c.b16 %v360, %v356
    %v481 = vpack.c.b16 %v365, %v361
    %v482 = vpack.c.b16 %v366, %v362
    %v483 = vpack.c.b16 %v367, %v363
    %v484 = vpack.c.b16 %v368, %v364
    %v485 = vpack.c.b16 %v373, %v369
    %v486 = vpack.c.b16 %v374, %v370
    %v487 = vpack.c.b16 %v375, %v371
    %v488 = vpack.c.b16 %v376, %v372
    %v489 = vpack.c.b16 %v381, %v377
    %v490 = vpack.c.b16 %v382, %v378
    %v491 = vpack.c.b16 %v383, %v379
    %v492 = vpack.c.b16 %v384, %v380
    %v493 = vpack.c.b16 %v389, %v385
    %v494 = vpack.c.b16 %v390, %v386
    %v495 = vpack.c.b16 %v391, %v387
    %v496 = vpack.c.b16 %v392, %v388
    %v497 = vpack.c.b16 %v397, %v393
    %v498 = vpack.c.b16 %v398, %v394
    %v499 = vpack.c.b16 %v399, %v395
    %v500 = vpack.c.b16 %v400, %v396
    %v501 = vpack.c.b16 %v405, %v401
    %v502 = vpack.c.b16 %v406, %v402
    %v503 = vpack.c.b16 %v407, %v403
    %v504 = vpack.c.b16 %v408, %v404
    %v505 = vpack.c.b16 %v413, %v409
    %v506 = vpack.c.b16 %v414, %v410
    %v507 = vpack.c.b16 %v415, %v411
    %v508 = vpack.c.b16 %v416, %v412
    %v509 = vpack.c.b16 %v421, %v417
    %v510 = vpack.c.b16 %v422, %v418
    %v511 = vpack.c.b16 %v423, %v419
    %v512 = vpack.c.b16 %v424, %v420
    %v513 = vpack.c.b16 %v429, %v425
    %v514 = vpack.c.b16 %v430, %v426
    %v515 = vpack.c.b16 %v431, %v427
    %v516 = vpack.c.b16 %v432, %v428
    %v517 = vpack.c.b16 %v437, %v433
    %v518 = vpack.c.b16 %v438, %v434
    %v519 = vpack.c.b16 %v439, %v435
    %v520 = vpack.c.b16 %v440, %v436
    %v521 = vpack.c.b16 %v445, %v441
    %v522 = vpack.c.b16 %v446, %v442
    %v523 = vpack.c.b16 %v447, %v443
    %v524 = vpack.c.b16 %v448, %v444
    %v525 = vpack.c.b16 %v453, %v449
    %v526 = vpack.c.b16 %v454, %v450
    %v527 = vpack.c.b16 %v455, %v451
    %v528 = vpack.c.b16 %v456, %v452
    %v529 = vpack.c.b16 %v461, %v457
    %v530 = vpack.c.b16 %v462, %v458
    %v531 = vpack.c.b16 %v463, %v459
    %v532 = vpack.c.b16 %v464, %v460
    %v533 = vpack.c.b16 %v469, %v465
    %v534 = vpack.c.b16 %v470, %v466
    %v535 = vpack.c.b16 %v471, %v467
    %v536 = vpack.c.b16 %v472, %v468
    %601 = vmatpush.bf16.msra.mxu0 %v501
    %602 = vmatpush.bf16.msra.mxu0 %v497
    %603 = vmatpush.bf16.msra.mxu0 %v493
    %604 = vmatpush.bf16.msra.mxu0 %v489
    %605 = vmatpush.bf16.msra.mxu0 %v485
    %606 = vmatpush.bf16.msra.mxu0 %v481
    %607 = vmatpush.bf16.msra.mxu0 %v477
    %608 = vmatpush.bf16.msra.mxu0 %v473
    %609 = vmatmul.bf16.gmra.mxu0 %v205
    %v610 = vpop.f32.mrf.mxu0
    %v611 = vadd.f32 %v273, %v610
    %v612 = vpop.f32.mrf.mxu0
    %613 = vdwg.mxu0
    %614 = vmatpush.bf16.msra.mxu0 %v533
    %615 = vmatpush.bf16.msra.mxu0 %v529
    %616 = vmatpush.bf16.msra.mxu0 %v525
    %617 = vmatpush.bf16.msra.mxu0 %v521
    %618 = vmatpush.bf16.msra.mxu0 %v517
    %619 = vmatpush.bf16.msra.mxu0 %v513
    %620 = vmatpush.bf16.msra.mxu0 %v509
    %621 = vmatpush.bf16.msra.mxu0 %v505
    %622 = vmatmul.bf16.gmra.mxu0 %v206
    %v623 = vpop.f32.mrf.mxu0
    %v624 = vadd.f32 %v611, %v623
    %v625 = vpop.f32.mrf.mxu0
    %626 = vdwg.mxu0
    %627 = vmatpush.bf16.msra.mxu0 %v502
    %628 = vmatpush.bf16.msra.mxu0 %v498
    %629 = vmatpush.bf16.msra.mxu0 %v494
    %630 = vmatpush.bf16.msra.mxu0 %v490
    %631 = vmatpush.bf16.msra.mxu0 %v486
    %632 = vmatpush.bf16.msra.mxu0 %v482
    %633 = vmatpush.bf16.msra.mxu0 %v478
    %634 = vmatpush.bf16.msra.mxu0 %v474
    %635 = vmatmul.bf16.gmra.mxu0 %v205
    %v636 = vpop.f32.mrf.mxu0
    %v637 = vadd.f32 %v274, %v636
    %v638 = vpop.f32.mrf.mxu0
    %639 = vdwg.mxu0
    %640 = vmatpush.bf16.msra.mxu0 %v534
    %641 = vmatpush.bf16.msra.mxu0 %v530
    %642 = vmatpush.bf16.msra.mxu0 %v526
    %643 = vmatpush.bf16.msra.mxu0 %v522
    %644 = vmatpush.bf16.msra.mxu0 %v518
    %645 = vmatpush.bf16.msra.mxu0 %v514
    %646 = vmatpush.bf16.msra.mxu0 %v510
    %647 = vmatpush.bf16.msra.mxu0 %v506
    %648 = vmatmul.bf16.gmra.mxu0 %v206
    %v649 = vpop.f32.mrf.mxu0
    %v650 = vadd.f32 %v637, %v649
    %v651 = vpop.f32.mrf.mxu0
    %652 = vdwg.mxu0
    %653 = vmatpush.bf16.msra.mxu0 %v503
    %654 = vmatpush.bf16.msra.mxu0 %v499
    %655 = vmatpush.bf16.msra.mxu0 %v495
    %656 = vmatpush.bf16.msra.mxu0 %v491
    %657 = vmatpush.bf16.msra.mxu0 %v487
    %658 = vmatpush.bf16.msra.mxu0 %v483
    %659 = vmatpush.bf16.msra.mxu0 %v479
    %660 = vmatpush.bf16.msra.mxu0 %v475
    %661 = vmatmul.bf16.gmra.mxu0 %v205
    %v662 = vpop.f32.mrf.mxu0
    %v663 = vadd.f32 %v275, %v662
    %v664 = vpop.f32.mrf.mxu0
    %665 = vdwg.mxu0
    %666 = vmatpush.bf16.msra.mxu0 %v535
    %667 = vmatpush.bf16.msra.mxu0 %v531
    %668 = vmatpush.bf16.msra.mxu0 %v527
    %669 = vmatpush.bf16.msra.mxu0 %v523
    %670 = vmatpush.bf16.msra.mxu0 %v519
    %671 = vmatpush.bf16.msra.mxu0 %v515
    %672 = vmatpush.bf16.msra.mxu0 %v511
    %673 = vmatpush.bf16.msra.mxu0 %v507
    %674 = vmatmul.bf16.gmra.mxu0 %v206
    %v675 = vpop.f32.mrf.mxu0
    %v676 = vadd.f32 %v663, %v675
    %v677 = vpop.f32.mrf.mxu0
    %678 = vdwg.mxu0
    %679 = vmatpush.bf16.msra.mxu0 %v504
    %680 = vmatpush.bf16.msra.mxu0 %v500
    %681 = vmatpush.bf16.msra.mxu0 %v496
    %682 = vmatpush.bf16.msra.mxu0 %v492
    %683 = vmatpush.bf16.msra.mxu0 %v488
    %684 = vmatpush.bf16.msra.mxu0 %v484
    %685 = vmatpush.bf16.msra.mxu0 %v480
    %686 = vmatpush.bf16.msra.mxu0 %v476
    %687 = vmatmul.bf16.gmra.mxu0 %v205
    %v688 = vpop.f32.mrf.mxu0
    %v689 = vadd.f32 %v276, %v688
    %v690 = vpop.f32.mrf.mxu0
    %691 = vdwg.mxu0
    %692 = vmatpush.bf16.msra.mxu0 %v536
    %693 = vmatpush.bf16.msra.mxu0 %v532
    %694 = vmatpush.bf16.msra.mxu0 %v528
    %695 = vmatpush.bf16.msra.mxu0 %v524
    %696 = vmatpush.bf16.msra.mxu0 %v520
    %697 = vmatpush.bf16.msra.mxu0 %v516
    %698 = vmatpush.bf16.msra.mxu0 %v512
    %699 = vmatpush.bf16.msra.mxu0 %v508
    %700 = vmatmul.bf16.gmra.mxu0 %v206
    %v701 = vpop.f32.mrf.mxu0
    %v702 = vadd.f32 %v689, %v701
    %v703 = vpop.f32.mrf.mxu0
    %704 = vdwg.mxu0
    %v705 = vmax.f32 %v624, 0.0
    %v706 = vmax.f32 %v650, 0.0
    %v707 = vmax.f32 %v676, 0.0
    %v708 = vmax.f32 %v702, 0.0
    %v709 = vpack.c.bf16 %v705, %v705
    %v710 = vpack.c.bf16 %v706, %v706
    %v711 = vpack.c.bf16 %v707, %v707
    %v712 = vpack.c.bf16 %v708, %v708
    %v713 = vld [vmem:[%s7] sm:$0xf]
    %v714 = vld [vmem:[%s7 + $0x4] sm:$0xf]
    %v715 = vld [vmem:[%s7 + $0x8] sm:$0xf]
    %v716 = vld [vmem:[%s7 + $0xc] sm:$0xf]
    %v717 = vld [vmem:[%s7 + $0x10] sm:$0xf]
    %v718 = vld [vmem:[%s7 + $0x14] sm:$0xf]
    %v719 = vld [vmem:[%s7 + $0x18] sm:$0xf]
    %v720 = vld [vmem:[%s7 + $0x1c] sm:$0xf]
    %v721 = vld [vmem:[%s7 + $0x20] sm:$0xf]
    %v722 = vld [vmem:[%s7 + $0x24] sm:$0xf]
    %v723 = vld [vmem:[%s7 + $0x28] sm:$0xf]
    %v724 = vld [vmem:[%s7 + $0x2c] sm:$0xf]
    %v725 = vld [vmem:[%s7 + $0x30] sm:$0xf]
    %v726 = vld [vmem:[%s7 + $0x34] sm:$0xf]
    %v727 = vld [vmem:[%s7 + $0x38] sm:$0xf]
    %v728 = vld [vmem:[%s7 + $0x3c] sm:$0xf]
    %v729 = vld [vmem:[%s7 + $0x40] sm:$0xf]
    %v730 = vld [vmem:[%s7 + $0x44] sm:$0xf]
    %v731 = vld [vmem:[%s7 + $0x48] sm:$0xf]
    %v732 = vld [vmem:[%s7 + $0x4c] sm:$0xf]
    %v733 = vld [vmem:[%s7 + $0x50] sm:$0xf]
    %v734 = vld [vmem:[%s7 + $0x54] sm:$0xf]
    %v735 = vld [vmem:[%s7 + $0x58] sm:$0xf]
    %v736 = vld [vmem:[%s7 + $0x5c] sm:$0xf]
    %v737 = vld [vmem:[%s7 + $0x60] sm:$0xf]
    %v738 = vld [vmem:[%s7 + $0x64] sm:$0xf]
    %v739 = vld [vmem:[%s7 + $0x68] sm:$0xf]
    %v740 = vld [vmem:[%s7 + $0x6c] sm:$0xf]
    %v741 = vld [vmem:[%s7 + $0x70] sm:$0xf]
    %v742 = vld [vmem:[%s7 + $0x74] sm:$0xf]
    %v743 = vld [vmem:[%s7 + $0x78] sm:$0xf]
    %v744 = vld [vmem:[%s7 + $0x7c] sm:$0xf]
    %v745 = vld [vmem:[%s7 + $0x80] sm:$0xf]
    %v746 = vld [vmem:[%s7 + $0x84] sm:$0xf]
    %v747 = vld [vmem:[%s7 + $0x88] sm:$0xf]
    %v748 = vld [vmem:[%s7 + $0x8c] sm:$0xf]
    %v749 = vld [vmem:[%s7 + $0x90] sm:$0xf]
    %v750 = vld [vmem:[%s7 + $0x94] sm:$0xf]
    %v751 = vld [vmem:[%s7 + $0x98] sm:$0xf]
    %v752 = vld [vmem:[%s7 + $0x9c] sm:$0xf]
    %v753 = vld [vmem:[%s7 + $0xa0] sm:$0xf]
    %v754 = vld [vmem:[%s7 + $0xa4] sm:$0xf]
    %v755 = vld [vmem:[%s7 + $0xa8] sm:$0xf]
    %v756 = vld [vmem:[%s7 + $0xac] sm:$0xf]
    %v757 = vld [vmem:[%s7 + $0xb0] sm:$0xf]
    %v758 = vld [vmem:[%s7 + $0xb4] sm:$0xf]
    %v759 = vld [vmem:[%s7 + $0xb8] sm:$0xf]
    %v760 = vld [vmem:[%s7 + $0xbc] sm:$0xf]
    %v761 = vld [vmem:[%s7 + $0xc0] sm:$0xf]
    %v762 = vld [vmem:[%s7 + $0xc4] sm:$0xf]
    %v763 = vld [vmem:[%s7 + $0xc8] sm:$0xf]
    %v764 = vld [vmem:[%s7 + $0xcc] sm:$0xf]
    %v765 = vld [vmem:[%s7 + $0xd0] sm:$0xf]
    %v766 = vld [vmem:[%s7 + $0xd4] sm:$0xf]
    %v767 = vld [vmem:[%s7 + $0xd8] sm:$0xf]
    %v768 = vld [vmem:[%s7 + $0xdc] sm:$0xf]
    %v769 = vld [vmem:[%s7 + $0xe0] sm:$0xf]
    %v770 = vld [vmem:[%s7 + $0xe4] sm:$0xf]
    %v771 = vld [vmem:[%s7 + $0xe8] sm:$0xf]
    %v772 = vld [vmem:[%s7 + $0xec] sm:$0xf]
    %v773 = vld [vmem:[%s7 + $0xf0] sm:$0xf]
    %v774 = vld [vmem:[%s7 + $0xf4] sm:$0xf]
    %v775 = vld [vmem:[%s7 + $0xf8] sm:$0xf]
    %v776 = vld [vmem:[%s7 + $0xfc] sm:$0xf]
    %v777 = vld [vmem:[%s8] sm:$0x1]
    %v779 = vperm.slane %v777, 0
    %v845 = vunpack.c.l.b16 %v713
    %v846 = vunpack.c.l.b16 %v714
    %v847 = vunpack.c.l.b16 %v715
    %v848 = vunpack.c.l.b16 %v716
    %v849 = vunpack.c.l.b16 %v717
    %v850 = vunpack.c.l.b16 %v718
    %v851 = vunpack.c.l.b16 %v719
    %v852 = vunpack.c.l.b16 %v720
    %v853 = vunpack.c.l.b16 %v721
    %v854 = vunpack.c.l.b16 %v722
    %v855 = vunpack.c.l.b16 %v723
    %v856 = vunpack.c.l.b16 %v724
    %v857 = vunpack.c.l.b16 %v725
    %v858 = vunpack.c.l.b16 %v726
    %v859 = vunpack.c.l.b16 %v727
    %v860 = vunpack.c.l.b16 %v728
    %v861 = vunpack.c.l.b16 %v729
    %v862 = vunpack.c.l.b16 %v730
    %v863 = vunpack.c.l.b16 %v731
    %v864 = vunpack.c.l.b16 %v732
    %v865 = vunpack.c.l.b16 %v733
    %v866 = vunpack.c.l.b16 %v734
    %v867 = vunpack.c.l.b16 %v735
    %v868 = vunpack.c.l.b16 %v736
    %v869 = vunpack.c.l.b16 %v737
    %v870 = vunpack.c.l.b16 %v738
    %v871 = vunpack.c.l.b16 %v739
    %v872 = vunpack.c.l.b16 %v740
    %v873 = vunpack.c.l.b16 %v741
    %v874 = vunpack.c.l.b16 %v742
    %v875 = vunpack.c.l.b16 %v743
    %v876 = vunpack.c.l.b16 %v744
    %v877 = vunpack.c.l.b16 %v745
    %v878 = vunpack.c.l.b16 %v746
    %v879 = vunpack.c.l.b16 %v747
    %v880 = vunpack.c.l.b16 %v748
    %v881 = vunpack.c.l.b16 %v749
    %v882 = vunpack.c.l.b16 %v750
    %v883 = vunpack.c.l.b16 %v751
    %v884 = vunpack.c.l.b16 %v752
    %v885 = vunpack.c.l.b16 %v753
    %v886 = vunpack.c.l.b16 %v754
    %v887 = vunpack.c.l.b16 %v755
    %v888 = vunpack.c.l.b16 %v756
    %v889 = vunpack.c.l.b16 %v757
    %v890 = vunpack.c.l.b16 %v758
    %v891 = vunpack.c.l.b16 %v759
    %v892 = vunpack.c.l.b16 %v760
    %v893 = vunpack.c.l.b16 %v761
    %v894 = vunpack.c.l.b16 %v762
    %v895 = vunpack.c.l.b16 %v763
    %v896 = vunpack.c.l.b16 %v764
    %v897 = vunpack.c.l.b16 %v765
    %v898 = vunpack.c.l.b16 %v766
    %v899 = vunpack.c.l.b16 %v767
    %v900 = vunpack.c.l.b16 %v768
    %v901 = vunpack.c.l.b16 %v769
    %v902 = vunpack.c.l.b16 %v770
    %v903 = vunpack.c.l.b16 %v771
    %v904 = vunpack.c.l.b16 %v772
    %v905 = vunpack.c.l.b16 %v773
    %v906 = vunpack.c.l.b16 %v774
    %v907 = vunpack.c.l.b16 %v775
    %v908 = vunpack.c.l.b16 %v776
    %v909 = vpack.c.b16 %v846, %v845
    %v910 = vpack.c.b16 %v848, %v847
    %v911 = vpack.c.b16 %v850, %v849
    %v912 = vpack.c.b16 %v852, %v851
    %v913 = vpack.c.b16 %v854, %v853
    %v914 = vpack.c.b16 %v856, %v855
    %v915 = vpack.c.b16 %v858, %v857
    %v916 = vpack.c.b16 %v860, %v859
    %v917 = vpack.c.b16 %v862, %v861
    %v918 = vpack.c.b16 %v864, %v863
    %v919 = vpack.c.b16 %v866, %v865
    %v920 = vpack.c.b16 %v868, %v867
    %v921 = vpack.c.b16 %v870, %v869
    %v922 = vpack.c.b16 %v872, %v871
    %v923 = vpack.c.b16 %v874, %v873
    %v924 = vpack.c.b16 %v876, %v875
    %v925 = vpack.c.b16 %v878, %v877
    %v926 = vpack.c.b16 %v880, %v879
    %v927 = vpack.c.b16 %v882, %v881
    %v928 = vpack.c.b16 %v884, %v883
    %v929 = vpack.c.b16 %v886, %v885
    %v930 = vpack.c.b16 %v888, %v887
    %v931 = vpack.c.b16 %v890, %v889
    %v932 = vpack.c.b16 %v892, %v891
    %v933 = vpack.c.b16 %v894, %v893
    %v934 = vpack.c.b16 %v896, %v895
    %v935 = vpack.c.b16 %v898, %v897
    %v936 = vpack.c.b16 %v900, %v899
    %v937 = vpack.c.b16 %v902, %v901
    %v938 = vpack.c.b16 %v904, %v903
    %v939 = vpack.c.b16 %v906, %v905
    %v940 = vpack.c.b16 %v908, %v907
    %973 = vmatpush.bf16.msra.mxu0 %v916
    %974 = vmatpush.bf16.msra.mxu0 %v915
    %975 = vmatpush.bf16.msra.mxu0 %v914
    %976 = vmatpush.bf16.msra.mxu0 %v913
    %977 = vmatpush.bf16.msra.mxu0 %v912
    %978 = vmatpush.bf16.msra.mxu0 %v911
    %979 = vmatpush.bf16.msra.mxu0 %v910
    %980 = vmatpush.bf16.msra.mxu0 %v909
    %981 = vmatmul.bf16.gmra.mxu0 %v709
    %v982 = vpop.f32.mrf.mxu0
    %v983 = vadd.f32 %v779, %v982
    %v984 = vpop.f32.mrf.mxu0
    %985 = vdwg.mxu0
    %986 = vmatpush.bf16.msra.mxu0 %v924
    %987 = vmatpush.bf16.msra.mxu0 %v923
    %988 = vmatpush.bf16.msra.mxu0 %v922
    %989 = vmatpush.bf16.msra.mxu0 %v921
    %990 = vmatpush.bf16.msra.mxu0 %v920
    %991 = vmatpush.bf16.msra.mxu0 %v919
    %992 = vmatpush.bf16.msra.mxu0 %v918
    %993 = vmatpush.bf16.msra.mxu0 %v917
    %994 = vmatmul.bf16.gmra.mxu0 %v710
    %v995 = vpop.f32.mrf.mxu0
    %v996 = vadd.f32 %v983, %v995
    %v997 = vpop.f32.mrf.mxu0
    %998 = vdwg.mxu0
    %999 = vmatpush.bf16.msra.mxu0 %v932
    %1000 = vmatpush.bf16.msra.mxu0 %v931
    %1001 = vmatpush.bf16.msra.mxu0 %v930
    %1002 = vmatpush.bf16.msra.mxu0 %v929
    %1003 = vmatpush.bf16.msra.mxu0 %v928
    %1004 = vmatpush.bf16.msra.mxu0 %v927
    %1005 = vmatpush.bf16.msra.mxu0 %v926
    %1006 = vmatpush.bf16.msra.mxu0 %v925
    %1007 = vmatmul.bf16.gmra.mxu0 %v711
    %v1008 = vpop.f32.mrf.mxu0
    %v1009 = vadd.f32 %v996, %v1008
    %v1010 = vpop.f32.mrf.mxu0
    %1011 = vdwg.mxu0
    %1012 = vmatpush.bf16.msra.mxu0 %v940
    %1013 = vmatpush.bf16.msra.mxu0 %v939
    %1014 = vmatpush.bf16.msra.mxu0 %v938
    %1015 = vmatpush.bf16.msra.mxu0 %v937
    %1016 = vmatpush.bf16.msra.mxu0 %v936
    %1017 = vmatpush.bf16.msra.mxu0 %v935
    %1018 = vmatpush.bf16.msra.mxu0 %v934
    %1019 = vmatpush.bf16.msra.mxu0 %v933
    %1020 = vmatmul.bf16.gmra.mxu0 %v712
    %v1021 = vpop.f32.mrf.mxu0
    %v1022 = vadd.f32 %v1009, %v1021
    %v1023 = vpop.f32.mrf.mxu0
    %1024 = vdwg.mxu0
    %1025 = vst [vmem:[#allocation2] sm:$0xff] %v1022
    // Predicated region
    $region38: #{fc4_forward.1} parent=1 // pred_check
      _
    $region39: #{fc4_forward.1} parent=1 // pred_check_branch
      %1027 = sbr.rel (0) target = $region41
    $region40: #{fc4_forward.1} parent=1 // pred_region
      %1029 = vsyncadd [#allocation3], 0
      %s1031 = sshll.u32 [#allocation2], 4
      %s1032 = int_to_ptr.vmem [resolvable:$true] %s1031
      %s1033 = sshll.u32 %s9, 4
      %s1034 = int_to_ptr.hbm [resolvable:$true] %s1033
      %1036 = dma.vmem_to_hbm [thread:$0]  %s1032, 128, %s1034, [#allocation3]
    $region41: #{fc4_forward.1} parent=1 // pred_fallthru
      _
    // Predicated region
    $region42: #{fc4_forward.1} parent=1 // pred_check
      _
    $region43: #{fc4_forward.1} parent=1 // pred_check_branch
      %1038 = sbr.rel (0) target = $region45
    $region44: #{fc4_forward.1} parent=1 // pred_region
      %1040 = dma.done [#allocation3], 128
    $region45: #{fc4_forward.1} parent=1 // pred_fallthru
      _
    %1041 = vsyncpa [#allocation3], 1

</llo_original>
